<compile_context>
chip_gen: v6e
topology: v6e:2x2x1
jax: 0.10.0
libtpu: 0.0.40
codegen_flags: <defaults>
</compile_context>

<pallas_src>
import functools

import jax
import jax.numpy as jnp
from jax.experimental import pallas as pl
from jax.experimental.pallas import tpu as pltpu

LANE = 128
SUBLANE = 8
NEG_INF = -1e30  # padded-action-lane bias; exp underflows to exactly 0


def _round_up(n, m):
    return ((n + m - 1) // m) * m


def actor_kernel(x_ref,
                 w1_ref, b1_ref,
                 w2_ref, b2_ref,
                 w3_ref, b3_ref,
                 w4_ref, b4_ref,
                 out_ref):
    """fc1->relu->fc2->relu->fc3->relu->fc4->softmax on one (TB, *) batch tile.

    All feature dims are pre-padded to multiples of 128 lanes, so every matmul
    is an aligned MXU tile and the output store is lane-dense. Padded action
    lanes hold a -1e30 bias, so the softmax assigns them probability 0.
    """
    h = jnp.dot(x_ref[...], w1_ref[...],
                preferred_element_type=jnp.float32) + b1_ref[...]
    h = jnp.maximum(h, 0.0)

    h = jnp.dot(h, w2_ref[...],
                preferred_element_type=jnp.float32) + b2_ref[...]
    h = jnp.maximum(h, 0.0)

    h = jnp.dot(h, w3_ref[...],
                preferred_element_type=jnp.float32) + b3_ref[...]
    h = jnp.maximum(h, 0.0)

    logits = jnp.dot(h, w4_ref[...],
                     preferred_element_type=jnp.float32) + b4_ref[...]

    # Numerically-stable softmax along the (padded) action axis.
    m = jnp.max(logits, axis=-1, keepdims=True)
    e = jnp.exp(logits - m)
    denom = jnp.sum(e, axis=-1, keepdims=True)
    # Exact reciprocal: keeps sum-to-1 / reference match at 1e-5.
    out_ref[...] = (e * pl.reciprocal(denom, approx=False)).astype(out_ref.dtype)


def pad_params(params):
    """Pad [in,out] weights / (1,out) biases to 128-lane-aligned shapes.

    Zero columns/rows are exact (ReLU(0)=0 and zero rows contribute nothing);
    padded action-logit lanes get a -1e30 bias so softmax zeroes them out.
    """
    w1, b1, w2, b2, w3, b3, w4, b4 = params
    h1, h2, h3, a = w1.shape[1], w2.shape[1], w3.shape[1], w4.shape[1]
    h1p, h2p, h3p, ap = (_round_up(d, LANE) for d in (h1, h2, h3, a))

    w1p = jnp.pad(w1, ((0, 0), (0, h1p - h1)))
    b1p = jnp.pad(b1, ((0, 0), (0, h1p - h1)))
    w2p = jnp.pad(w2, ((0, h1p - h1), (0, h2p - h2)))
    b2p = jnp.pad(b2, ((0, 0), (0, h2p - h2)))
    w3p = jnp.pad(w3, ((0, h2p - h2), (0, h3p - h3)))
    b3p = jnp.pad(b3, ((0, 0), (0, h3p - h3)))
    w4p = jnp.pad(w4, ((0, h3p - h3), (0, ap - a)))
    b4p = jnp.pad(b4, ((0, 0), (0, ap - a)), constant_values=NEG_INF)
    return (w1p, b1p, w2p, b2p, w3p, b3p, w4p, b4p)


@functools.partial(jax.jit, static_argnames=("action_size", "block_batch"))
def actor_forward(x, padded_params, action_size, block_batch=256):
    """Batch-tiled pallas_call; weights stay VMEM-resident across grid steps."""
    w1, b1, w2, b2, w3, b3, w4, b4 = padded_params
    batch, s = x.shape
    ap = w4.shape[1]

    # Batch tile: multiple of 8 sublanes, capped at block_batch (small enough
    # to stay well inside v7x's 64 MiB VMEM while still filling MXU rows).
    pb = _round_up(batch, SUBLANE)
    tb = min(block_batch, pb)
    pb = _round_up(batch, tb)
    grid = (pb // tb,)

    xp = jnp.pad(x, ((0, pb - batch), (0, 0))) if pb != batch else x

    resident = lambda i: (0, 0)  # weights/biases: same block every grid step
    grid_spec = pltpu.PrefetchScalarGridSpec(
        num_scalar_prefetch=0,
        grid=grid,
        in_specs=[
            pl.BlockSpec((tb, s), lambda i: (i, 0)),   # x: tiled over batch
            pl.BlockSpec(w1.shape, resident),
            pl.BlockSpec(b1.shape, resident),
            pl.BlockSpec(w2.shape, resident),
            pl.BlockSpec(b2.shape, resident),
            pl.BlockSpec(w3.shape, resident),
            pl.BlockSpec(b3.shape, resident),
            pl.BlockSpec(w4.shape, resident),
            pl.BlockSpec(b4.shape, resident),
        ],
        out_specs=pl.BlockSpec((tb, ap), lambda i: (i, 0)),
    )

    probs_padded = pl.pallas_call(
        actor_kernel,
        out_shape=jax.ShapeDtypeStruct((pb, ap), jnp.float32),
        grid_spec=grid_spec,
        compiler_params=pltpu.CompilerParams(
            dimension_semantics=("parallel",),
        ),
    )(xp, w1, b1, w2, b2, w3, b3, w4, b4)

    # Slice padded batch rows and padded action lanes back off.
    return probs_padded[:batch, :action_size]


def init_params(key, state_size, action_size):
    """Deterministic init matching nn.Linear shapes (stored transposed: [in, out]).
    Biases kept 2D (1, out) for clean VMEM broadcasting."""
    dims = [(state_size, 64), (64, 128), (128, 64), (64, action_size)]
    params = []
    for i, (fan_in, fan_out) in enumerate(dims):
        kw, kb, key = jax.random.split(jax.random.fold_in(key, i), 3)
        bound = 1.0 / jnp.sqrt(float(fan_in))  # PyTorch default uniform bound
        w = jax.random.uniform(kw, (fan_in, fan_out), jnp.float32, -bound, bound)
        b = jax.random.uniform(kb, (1, fan_out), jnp.float32, -bound, bound)
        params += [w, b]
    return params


def reference_forward(x, params):
    """Plain-JAX reference for sanity checking (un-padded params)."""
    w1, b1, w2, b2, w3, b3, w4, b4 = params
    h = jnp.maximum(x @ w1 + b1, 0.0)
    h = jnp.maximum(h @ w2 + b2, 0.0)
    h = jnp.maximum(h @ w3 + b3, 0.0)
    logits = h @ w4 + b4
    return jax.nn.softmax(logits, axis=-1)


if __name__ == "__main__":
    key = jax.random.PRNGKey(0)
    batch, state_size, action_size = 2, 8, 4

    kx, kp = jax.random.split(key)
    x = jax.random.normal(kx, (batch, state_size), dtype=jnp.float32)
    params = init_params(kp, state_size, action_size)
    padded_params = pad_params(params)

    # Small RL-step-sized batch (single grid step).
    probs = actor_forward(x, padded_params, action_size)
    probs = jax.block_until_ready(probs)
    ref = reference_forward(x, params)
    assert probs.shape == (batch, action_size)
    assert jnp.allclose(jnp.sum(probs, axis=-1), 1.0, atol=1e-5)
    assert jnp.allclose(probs, ref, atol=1e-5, rtol=1e-5)

    # Larger batch that actually exercises the batch-tiled grid (4 tiles of 256).
    big_batch = 1024
    xb = jax.random.normal(jax.random.fold_in(kx, 1), (big_batch, state_size),
                           dtype=jnp.float32)
    probs_b = jax.block_until_ready(actor_forward(xb, padded_params, action_size))
    ref_b = reference_forward(xb, params)
    assert probs_b.shape == (big_batch, action_size)
    assert jnp.allclose(probs_b, ref_b, atol=1e-5, rtol=1e-5)

    print("KERNEL_OK")
</pallas_src>

<mosaic_0001>
module attributes {stable_mosaic.version = 11 : i64} {
  func.func @actor_kernel(%arg0: i32, %arg1: memref<8x8xf32, #tpu.memory_space<vmem>>, %arg2: memref<8x128xf32, #tpu.memory_space<vmem>>, %arg3: memref<1x128xf32, #tpu.memory_space<vmem>>, %arg4: memref<128x128xf32, #tpu.memory_space<vmem>>, %arg5: memref<1x128xf32, #tpu.memory_space<vmem>>, %arg6: memref<128x128xf32, #tpu.memory_space<vmem>>, %arg7: memref<1x128xf32, #tpu.memory_space<vmem>>, %arg8: memref<128x128xf32, #tpu.memory_space<vmem>>, %arg9: memref<1x128xf32, #tpu.memory_space<vmem>>, %arg10: memref<8x128xf32, #tpu.memory_space<vmem>>) attributes {dimension_semantics = [#tpu.dimension_semantics<parallel>], iteration_bounds = array<i64: 1>, scalar_prefetch = 0 : i64, scratch_operands = 0 : i64, tpu.core_type = #tpu.core_type<tc>, window_params = [{transform_indices = @transform_0, window_bounds = array<i64: 8, 8>}, {pipeline_mode = #tpu.pipeline_mode<synchronous>, transform_indices = @transform_1, window_bounds = array<i64: 8, 128>}, {pipeline_mode = #tpu.pipeline_mode<synchronous>, transform_indices = @transform_2, window_bounds = array<i64: 1, 128>}, {pipeline_mode = #tpu.pipeline_mode<synchronous>, transform_indices = @transform_3, window_bounds = array<i64: 128, 128>}, {pipeline_mode = #tpu.pipeline_mode<synchronous>, transform_indices = @transform_4, window_bounds = array<i64: 1, 128>}, {pipeline_mode = #tpu.pipeline_mode<synchronous>, transform_indices = @transform_5, window_bounds = array<i64: 128, 128>}, {pipeline_mode = #tpu.pipeline_mode<synchronous>, transform_indices = @transform_6, window_bounds = array<i64: 1, 128>}, {pipeline_mode = #tpu.pipeline_mode<synchronous>, transform_indices = @transform_7, window_bounds = array<i64: 128, 128>}, {pipeline_mode = #tpu.pipeline_mode<synchronous>, transform_indices = @transform_8, window_bounds = array<i64: 1, 128>}, {transform_indices = @transform_9, window_bounds = array<i64: 8, 128>}]} {
    %c0 = arith.constant 0 : index
    %c0_0 = arith.constant 0 : index
    %0 = vector.load %arg1[%c0, %c0_0] : memref<8x8xf32, #tpu.memory_space<vmem>>, vector<8x8xf32>
    %c0_1 = arith.constant 0 : index
    %c0_2 = arith.constant 0 : index
    %1 = vector.load %arg2[%c0_1, %c0_2] : memref<8x128xf32, #tpu.memory_space<vmem>>, vector<8x128xf32>
    %cst = arith.constant dense<0.000000e+00> : vector<8x128xf32>
    %2 = tpu.matmul %0, %1, %cst {dimension_numbers = #tpu.dot_dimension_numbers<[1], [0], [0], [1], [0, 0, 1, 1], [], []>} : vector<8x8xf32>, vector<8x128xf32>, vector<8x128xf32> -> vector<8x128xf32>
    %c0_3 = arith.constant 0 : index
    %c0_4 = arith.constant 0 : index
    %3 = vector.load %arg3[%c0_3, %c0_4] : memref<1x128xf32, #tpu.memory_space<vmem>>, vector<1x128xf32>
    %4 = vector.broadcast %3 : vector<1x128xf32> to vector<8x128xf32>
    %5 = arith.addf %2, %4 : vector<8x128xf32>
    %cst_5 = arith.constant 0.000000e+00 : f32
    %6 = vector.broadcast %cst_5 : f32 to vector<8x128xf32>
    %7 = arith.maximumf %5, %6 : vector<8x128xf32>
    %c0_6 = arith.constant 0 : index
    %c0_7 = arith.constant 0 : index
    %8 = vector.load %arg4[%c0_6, %c0_7] : memref<128x128xf32, #tpu.memory_space<vmem>>, vector<128x128xf32>
    %cst_8 = arith.constant dense<0.000000e+00> : vector<8x128xf32>
    %9 = tpu.matmul %7, %8, %cst_8 {dimension_numbers = #tpu.dot_dimension_numbers<[1], [0], [0], [1], [0, 0, 1, 1], [], []>} : vector<8x128xf32>, vector<128x128xf32>, vector<8x128xf32> -> vector<8x128xf32>
    %c0_9 = arith.constant 0 : index
    %c0_10 = arith.constant 0 : index
    %10 = vector.load %arg5[%c0_9, %c0_10] : memref<1x128xf32, #tpu.memory_space<vmem>>, vector<1x128xf32>
    %11 = vector.broadcast %10 : vector<1x128xf32> to vector<8x128xf32>
    %12 = arith.addf %9, %11 : vector<8x128xf32>
    %cst_11 = arith.constant 0.000000e+00 : f32
    %13 = vector.broadcast %cst_11 : f32 to vector<8x128xf32>
    %14 = arith.maximumf %12, %13 : vector<8x128xf32>
    %c0_12 = arith.constant 0 : index
    %c0_13 = arith.constant 0 : index
    %15 = vector.load %arg6[%c0_12, %c0_13] : memref<128x128xf32, #tpu.memory_space<vmem>>, vector<128x128xf32>
    %cst_14 = arith.constant dense<0.000000e+00> : vector<8x128xf32>
    %16 = tpu.matmul %14, %15, %cst_14 {dimension_numbers = #tpu.dot_dimension_numbers<[1], [0], [0], [1], [0, 0, 1, 1], [], []>} : vector<8x128xf32>, vector<128x128xf32>, vector<8x128xf32> -> vector<8x128xf32>
    %c0_15 = arith.constant 0 : index
    %c0_16 = arith.constant 0 : index
    %17 = vector.load %arg7[%c0_15, %c0_16] : memref<1x128xf32, #tpu.memory_space<vmem>>, vector<1x128xf32>
    %18 = vector.broadcast %17 : vector<1x128xf32> to vector<8x128xf32>
    %19 = arith.addf %16, %18 : vector<8x128xf32>
    %cst_17 = arith.constant 0.000000e+00 : f32
    %20 = vector.broadcast %cst_17 : f32 to vector<8x128xf32>
    %21 = arith.maximumf %19, %20 : vector<8x128xf32>
    %c0_18 = arith.constant 0 : index
    %c0_19 = arith.constant 0 : index
    %22 = vector.load %arg8[%c0_18, %c0_19] : memref<128x128xf32, #tpu.memory_space<vmem>>, vector<128x128xf32>
    %cst_20 = arith.constant dense<0.000000e+00> : vector<8x128xf32>
    %23 = tpu.matmul %21, %22, %cst_20 {dimension_numbers = #tpu.dot_dimension_numbers<[1], [0], [0], [1], [0, 0, 1, 1], [], []>} : vector<8x128xf32>, vector<128x128xf32>, vector<8x128xf32> -> vector<8x128xf32>
    %c0_21 = arith.constant 0 : index
    %c0_22 = arith.constant 0 : index
    %24 = vector.load %arg9[%c0_21, %c0_22] : memref<1x128xf32, #tpu.memory_space<vmem>>, vector<1x128xf32>
    %25 = vector.broadcast %24 : vector<1x128xf32> to vector<8x128xf32>
    %26 = arith.addf %23, %25 : vector<8x128xf32>
    %cst_23 = arith.constant dense<0xFF800000> : vector<8xf32>
    %27 = vector.multi_reduction <maximumf>, %26, %cst_23 [1] : vector<8x128xf32> to vector<8xf32>
    %28 = vector.shape_cast %27 : vector<8xf32> to vector<8x1xf32>
    %29 = vector.broadcast %28 : vector<8x1xf32> to vector<8x128xf32>
    %30 = arith.subf %26, %29 : vector<8x128xf32>
    %31 = math.exp %30 : vector<8x128xf32>
    %cst_24 = arith.constant dense<0.000000e+00> : vector<8xf32>
    %32 = vector.multi_reduction <add>, %31, %cst_24 [1] : vector<8x128xf32> to vector<8xf32>
    %33 = vector.shape_cast %32 : vector<8xf32> to vector<8x1xf32>
    %34 = tpu.reciprocal %33 : vector<8x1xf32> -> vector<8x1xf32>
    %35 = vector.broadcast %34 : vector<8x1xf32> to vector<8x128xf32>
    %36 = arith.mulf %31, %35 : vector<8x128xf32>
    %c0_25 = arith.constant 0 : index
    %c0_26 = arith.constant 0 : index
    %37 = vector.load %arg10[%c0_25, %c0_26] : memref<8x128xf32, #tpu.memory_space<vmem>>, vector<8x128xf32>
    tpu.vector_store %arg10[%c0_25, %c0_26], %36 {strides = array<i32>} : memref<8x128xf32, #tpu.memory_space<vmem>>, vector<8x128xf32>,
    return
  }
  func.func @transform_0(%arg0: i32) -> (i32, i32) {
    %c0_i32 = arith.constant 0 : i32
    %c0_i32_0 = arith.constant 0 : i32
    return %arg0, %c0_i32 : i32, i32
  }
  func.func @transform_1(%arg0: i32) -> (i32, i32) {
    %c0_i32 = arith.constant 0 : i32
    %c0_i32_0 = arith.constant 0 : i32
    %c0_i32_1 = arith.constant 0 : i32
    return %c0_i32, %c0_i32_0 : i32, i32
  }
  func.func @transform_2(%arg0: i32) -> (i32, i32) {
    %c0_i32 = arith.constant 0 : i32
    %c0_i32_0 = arith.constant 0 : i32
    %c0_i32_1 = arith.constant 0 : i32
    return %c0_i32, %c0_i32_0 : i32, i32
  }
  func.func @transform_3(%arg0: i32) -> (i32, i32) {
    %c0_i32 = arith.constant 0 : i32
    %c0_i32_0 = arith.constant 0 : i32
    %c0_i32_1 = arith.constant 0 : i32
    return %c0_i32, %c0_i32_0 : i32, i32
  }
  func.func @transform_4(%arg0: i32) -> (i32, i32) {
    %c0_i32 = arith.constant 0 : i32
    %c0_i32_0 = arith.constant 0 : i32
    %c0_i32_1 = arith.constant 0 : i32
    return %c0_i32, %c0_i32_0 : i32, i32
  }
  func.func @transform_5(%arg0: i32) -> (i32, i32) {
    %c0_i32 = arith.constant 0 : i32
    %c0_i32_0 = arith.constant 0 : i32
    %c0_i32_1 = arith.constant 0 : i32
    return %c0_i32, %c0_i32_0 : i32, i32
  }
  func.func @transform_6(%arg0: i32) -> (i32, i32) {
    %c0_i32 = arith.constant 0 : i32
    %c0_i32_0 = arith.constant 0 : i32
    %c0_i32_1 = arith.constant 0 : i32
    return %c0_i32, %c0_i32_0 : i32, i32
  }
  func.func @transform_7(%arg0: i32) -> (i32, i32) {
    %c0_i32 = arith.constant 0 : i32
    %c0_i32_0 = arith.constant 0 : i32
    %c0_i32_1 = arith.constant 0 : i32
    return %c0_i32, %c0_i32_0 : i32, i32
  }
  func.func @transform_8(%arg0: i32) -> (i32, i32) {
    %c0_i32 = arith.constant 0 : i32
    %c0_i32_0 = arith.constant 0 : i32
    %c0_i32_1 = arith.constant 0 : i32
    return %c0_i32, %c0_i32_0 : i32, i32
  }
  func.func @transform_9(%arg0: i32) -> (i32, i32) {
    %c0_i32 = arith.constant 0 : i32
    %c0_i32_0 = arith.constant 0 : i32
    return %arg0, %c0_i32 : i32, i32
  }
}

</mosaic_0001>

<llo_original>
// kernel: actor_forward.1
$region0: #{actor_forward.1}
  #allocation0 [shape = 'u32[]', space=smem, size = 0x4, offset = 0x4, fixed_abs, tag = 'smem constant byte address 0x4 - core index']
  #allocation1 [shape = 'u32[144,128]{1,0:T(1,128)}', space=vmem, size = 0x12000, scoped, tag = 'internal scratch']
  %s0 = inlined_call_operand.vmem [shape: f32[8,8], index: 0, kind: input, shape index: {}]
  %s1 = inlined_call_operand.vmem [shape: f32[8,128], index: 1, kind: input, shape index: {}]
  %s2 = inlined_call_operand.vmem [shape: f32[1,128], index: 2, kind: input, shape index: {}]
  %s3 = inlined_call_operand.hbm [shape: f32[128,128], index: 3, kind: input, shape index: {}]
  %s4 = inlined_call_operand.vmem [shape: f32[1,128], index: 4, kind: input, shape index: {}]
  %s5 = inlined_call_operand.hbm [shape: f32[128,128], index: 5, kind: input, shape index: {}]
  %s6 = inlined_call_operand.vmem [shape: f32[1,128], index: 6, kind: input, shape index: {}]
  %s7 = inlined_call_operand.hbm [shape: f32[128,128], index: 7, kind: input, shape index: {}]
  %s8 = inlined_call_operand.vmem [shape: f32[1,128], index: 8, kind: input, shape index: {}]
  %s9 = inlined_call_operand.vmem [shape: f32[8,128], index: 9, kind: output, shape index: {}]
  %s10 = sld [smem:[#allocation0]]
  $region58: #{actor_forward.1} parent=0
    _
  %s12 = ssub.s32 1, %s10
  %s13 = scalar_select 0, %s12, %s10
  $region1: #{actor_forward.1} parent=0
    #allocation2 [shape = 'u8[65536]{0}', space=vmem, size = 0x10000, scoped, tag = 'input window, operand 3, single buffered']
    #allocation3 [shape = 's32[1]{0}', space=sflag, size = 0x4, scoped, tag = 'scoped memory for actor_forward.1']
    #allocation4 [shape = 'u8[65536]{0}', space=vmem, size = 0x10000, scoped, tag = 'input window, operand 5, single buffered']
    #allocation5 [shape = 's32[1]{0}', space=sflag, size = 0x4, scoped, tag = 'scoped memory for actor_forward.1']
    #allocation6 [shape = 'u8[65536]{0}', space=vmem, size = 0x10000, scoped, tag = 'input window, operand 7, single buffered']
    %14 = vsyncpa [#allocation3], 0
    %15 = vsyncpa [#allocation5], 0
    // Predicated region
    $region2: #{actor_forward.1} parent=1 // pred_check
      _
    $region3: #{actor_forward.1} parent=1 // pred_check_branch
      %17 = sbr.rel (0) target = $region5
    $region4: #{actor_forward.1} parent=1 // pred_region
      _
    $region5: #{actor_forward.1} parent=1 // pred_fallthru
      _
    // Predicated region
    $region6: #{actor_forward.1} parent=1 // pred_check
      _
    $region7: #{actor_forward.1} parent=1 // pred_check_branch
      %19 = sbr.rel (0) target = $region9
    $region8: #{actor_forward.1} parent=1 // pred_region
      _
    $region9: #{actor_forward.1} parent=1 // pred_fallthru
      _
    // Predicated region
    $region10: #{actor_forward.1} parent=1 // pred_check
      _
    $region11: #{actor_forward.1} parent=1 // pred_check_branch
      %21 = sbr.rel (0) target = $region13
    $region12: #{actor_forward.1} parent=1 // pred_region
      _
    $region13: #{actor_forward.1} parent=1 // pred_fallthru
      _
    // Predicated region
    $region14: #{actor_forward.1} parent=1 // pred_check
      _
    $region15: #{actor_forward.1} parent=1 // pred_check_branch
      %23 = sbr.rel (0) target = $region17
    $region16: #{actor_forward.1} parent=1 // pred_region
      %s25 = ssub.s32 2048, 2048
      %26 = vsyncadd [#allocation3], %s25
      %s27 = sshll.u32 [#allocation2], 4
      %s28 = int_to_ptr.vmem [resolvable:$true] %s27
      %33 = dma.hbm_to_vmem [thread:$0]  %s3, 2048, %s28, [#allocation3], 128, 128, 8
    $region17: #{actor_forward.1} parent=1 // pred_fallthru
      _
    // Predicated region
    $region18: #{actor_forward.1} parent=1 // pred_check
      _
    $region19: #{actor_forward.1} parent=1 // pred_check_branch
      %35 = sbr.rel (0) target = $region21
    $region20: #{actor_forward.1} parent=1 // pred_region
      _
    $region21: #{actor_forward.1} parent=1 // pred_fallthru
      _
    // Predicated region
    $region22: #{actor_forward.1} parent=1 // pred_check
      _
    $region23: #{actor_forward.1} parent=1 // pred_check_branch
      %37 = sbr.rel (0) target = $region25
    $region24: #{actor_forward.1} parent=1 // pred_region
      %s39 = ssub.s32 2048, 2048
      %40 = vsyncadd [#allocation5], %s39
      %s41 = sshll.u32 [#allocation4], 4
      %s42 = int_to_ptr.vmem [resolvable:$true] %s41
      %47 = dma.hbm_to_vmem [thread:$0]  %s5, 2048, %s42, [#allocation5], 128, 128, 8
    $region25: #{actor_forward.1} parent=1 // pred_fallthru
      _
    // Predicated region
    $region26: #{actor_forward.1} parent=1 // pred_check
      _
    $region27: #{actor_forward.1} parent=1 // pred_check_branch
      %49 = sbr.rel (0) target = $region29
    $region28: #{actor_forward.1} parent=1 // pred_region
      _
    $region29: #{actor_forward.1} parent=1 // pred_fallthru
      _
    // Predicated region
    $region30: #{actor_forward.1} parent=1 // pred_check
      _
    $region31: #{actor_forward.1} parent=1 // pred_check_branch
      %51 = sbr.rel (0) target = $region33
    $region32: #{actor_forward.1} parent=1 // pred_region
      %s53 = ssub.s32 2048, 2048
      %54 = vsyncadd [#allocation5], %s53
      %s55 = sshll.u32 [#allocation6], 4
      %s56 = int_to_ptr.vmem [resolvable:$true] %s55
      %61 = dma.hbm_to_vmem [thread:$0]  %s7, 2048, %s56, [#allocation5], 128, 128, 8
    $region33: #{actor_forward.1} parent=1 // pred_fallthru
      _
    // Predicated region
    $region34: #{actor_forward.1} parent=1 // pred_check
      _
    $region35: #{actor_forward.1} parent=1 // pred_check_branch
      %63 = sbr.rel (0) target = $region37
    $region36: #{actor_forward.1} parent=1 // pred_region
      _
    $region37: #{actor_forward.1} parent=1 // pred_fallthru
      _
    // Predicated region
    $region38: #{actor_forward.1} parent=1 // pred_check
      _
    $region39: #{actor_forward.1} parent=1 // pred_check_branch
      %65 = sbr.rel (0) target = $region41
    $region40: #{actor_forward.1} parent=1 // pred_region
      %66 = dma.done [#allocation3], 2048
    $region41: #{actor_forward.1} parent=1 // pred_fallthru
      _
    // Predicated region
    $region42: #{actor_forward.1} parent=1 // pred_check
      _
    $region43: #{actor_forward.1} parent=1 // pred_check_branch
      %68 = sbr.rel (0) target = $region45
    $region44: #{actor_forward.1} parent=1 // pred_region
      %69 = dma.done [#allocation5], 2048
    $region45: #{actor_forward.1} parent=1 // pred_fallthru
      _
    // Predicated region
    $region46: #{actor_forward.1} parent=1 // pred_check
      _
    $region47: #{actor_forward.1} parent=1 // pred_check_branch
      %71 = sbr.rel (0) target = $region49
    $region48: #{actor_forward.1} parent=1 // pred_region
      %72 = dma.done [#allocation5], 2048
    $region49: #{actor_forward.1} parent=1 // pred_fallthru
      _
    %v73 = vld [vmem:[%s0] sm:$0xff]
    %v74 = vld [vmem:[%s1] sm:$0xff]
    %v75 = vld [vmem:[%s2] sm:$0x1]
    %v77 = vlaneseq
    %v78 = vshrl.u32 %v77, 7
    %v79 = vsub.s32 0, %v78
    %v80 = vrot.slane %v75, %v79
    %vm82 = vcmask 64512
    %v84 = vsel %vm82, %v73, 0
    %86 = vmatprep.subr.mxu0 0.0
    %87 = vmatpush1.msra.mxu0 0.0
    %88 = vmatprep.subr.mxu0 0.0
    %89 = vmatpush1.msra.mxu0 0.0
    %90 = vmatprep.subr.mxu0 0.0
    %91 = vmatpush1.msra.mxu0 0.0
    %92 = vmatprep.subr.mxu0 0.0
    %93 = vmatpush1.msra.mxu0 0.0
    %94 = vmatprep.subr.mxu0 0.0
    %95 = vmatpush1.msra.mxu0 0.0
    %96 = vmatprep.subr.mxu0 0.0
    %97 = vmatpush1.msra.mxu0 0.0
    %98 = vmatprep.subr.mxu0 0.0
    %99 = vmatpush1.msra.mxu0 0.0
    %100 = vmatprep.subr.mxu0 0.0
    %101 = vmatpush1.msra.mxu0 0.0
    %102 = vmatprep.subr.mxu0 0.0
    %103 = vmatpush1.msra.mxu0 0.0
    %104 = vmatprep.subr.mxu0 0.0
    %105 = vmatpush1.msra.mxu0 0.0
    %106 = vmatprep.subr.mxu0 0.0
    %107 = vmatpush1.msra.mxu0 0.0
    %108 = vmatprep.subr.mxu0 0.0
    %109 = vmatpush1.msra.mxu0 0.0
    %110 = vmatprep.subr.mxu0 0.0
    %111 = vmatpush1.msra.mxu0 0.0
    %112 = vmatprep.subr.mxu0 0.0
    %113 = vmatpush1.msra.mxu0 0.0
    %114 = vmatprep.subr.mxu0 0.0
    %115 = vmatpush1.msra.mxu0 0.0
    %116 = vmatprep.subr.mxu0 0.0
    %117 = vmatpush1.msra.mxu0 %v74
    %118 = vmatprep.subr.mxu0 0.0
    %119 = vmatpush2.msra.mxu0 0.0
    %120 = vmatprep.subr.mxu0 0.0
    %121 = vmatpush2.msra.mxu0 0.0
    %122 = vmatprep.subr.mxu0 0.0
    %123 = vmatpush2.msra.mxu0 0.0
    %124 = vmatprep.subr.mxu0 0.0
    %125 = vmatpush2.msra.mxu0 0.0
    %126 = vmatprep.subr.mxu0 0.0
    %127 = vmatpush2.msra.mxu0 0.0
    %128 = vmatprep.subr.mxu0 0.0
    %129 = vmatpush2.msra.mxu0 0.0
    %130 = vmatprep.subr.mxu0 0.0
    %131 = vmatpush2.msra.mxu0 0.0
    %132 = vmatprep.subr.mxu0 0.0
    %133 = vmatpush2.msra.mxu0 0.0
    %134 = vmatprep.subr.mxu0 0.0
    %135 = vmatpush2.msra.mxu0 0.0
    %136 = vmatprep.subr.mxu0 0.0
    %137 = vmatpush2.msra.mxu0 0.0
    %138 = vmatprep.subr.mxu0 0.0
    %139 = vmatpush2.msra.mxu0 0.0
    %140 = vmatprep.subr.mxu0 0.0
    %141 = vmatpush2.msra.mxu0 0.0
    %142 = vmatprep.subr.mxu0 0.0
    %143 = vmatpush2.msra.mxu0 0.0
    %144 = vmatprep.subr.mxu0 0.0
    %145 = vmatpush2.msra.mxu0 0.0
    %146 = vmatprep.subr.mxu0 0.0
    %147 = vmatpush2.msra.mxu0 0.0
    %148 = vmatprep.subr.mxu0 0.0
    %149 = vmatpush2.msra.mxu0 0.0
    %150 = vmatprep.mubr.f32.mxu0 0.0
    %151 = vmatmul.mubr.f32.gmra.mxu0 %v84
    %v152 = vpop.f32.mrf.mxu0
    %v153 = vadd.f32 %v80, %v152
    %v154 = vpop.f32.mrf.mxu0
    %155 = vdwg.mxu0
    %v156 = vmax.f32 %v153, 0.0
    %v157 = vld [vmem:[#allocation2] sm:$0xff]
    %v158 = vld [vmem:[#allocation2 + $0x8] sm:$0xff]
    %v159 = vld [vmem:[#allocation2 + $0x10] sm:$0xff]
    %v160 = vld [vmem:[#allocation2 + $0x18] sm:$0xff]
    %v161 = vld [vmem:[#allocation2 + $0x20] sm:$0xff]
    %v162 = vld [vmem:[#allocation2 + $0x28] sm:$0xff]
    %v163 = vld [vmem:[#allocation2 + $0x30] sm:$0xff]
    %v164 = vld [vmem:[#allocation2 + $0x38] sm:$0xff]
    %v165 = vld [vmem:[#allocation2 + $0x40] sm:$0xff]
    %v166 = vld [vmem:[#allocation2 + $0x48] sm:$0xff]
    %v167 = vld [vmem:[#allocation2 + $0x50] sm:$0xff]
    %v168 = vld [vmem:[#allocation2 + $0x58] sm:$0xff]
    %v169 = vld [vmem:[#allocation2 + $0x60] sm:$0xff]
    %v170 = vld [vmem:[#allocation2 + $0x68] sm:$0xff]
    %v171 = vld [vmem:[#allocation2 + $0x70] sm:$0xff]
    %v172 = vld [vmem:[#allocation2 + $0x78] sm:$0xff]
    %v173 = vld [vmem:[%s4] sm:$0x1]
    %v175 = vlaneseq
    %v176 = vshrl.u32 %v175, 7
    %v177 = vsub.s32 0, %v176
    %v178 = vrot.slane %v173, %v177
    %180 = vmatprep.subr.mxu0 0.0
    %181 = vmatpush1.msra.mxu0 %v172
    %182 = vmatprep.subr.mxu0 0.0
    %183 = vmatpush1.msra.mxu0 %v171
    %184 = vmatprep.subr.mxu0 0.0
    %185 = vmatpush1.msra.mxu0 %v170
    %186 = vmatprep.subr.mxu0 0.0
    %187 = vmatpush1.msra.mxu0 %v169
    %188 = vmatprep.subr.mxu0 0.0
    %189 = vmatpush1.msra.mxu0 %v168
    %190 = vmatprep.subr.mxu0 0.0
    %191 = vmatpush1.msra.mxu0 %v167
    %192 = vmatprep.subr.mxu0 0.0
    %193 = vmatpush1.msra.mxu0 %v166
    %194 = vmatprep.subr.mxu0 0.0
    %195 = vmatpush1.msra.mxu0 %v165
    %196 = vmatprep.subr.mxu0 0.0
    %197 = vmatpush1.msra.mxu0 %v164
    %198 = vmatprep.subr.mxu0 0.0
    %199 = vmatpush1.msra.mxu0 %v163
    %200 = vmatprep.subr.mxu0 0.0
    %201 = vmatpush1.msra.mxu0 %v162
    %202 = vmatprep.subr.mxu0 0.0
    %203 = vmatpush1.msra.mxu0 %v161
    %204 = vmatprep.subr.mxu0 0.0
    %205 = vmatpush1.msra.mxu0 %v160
    %206 = vmatprep.subr.mxu0 0.0
    %207 = vmatpush1.msra.mxu0 %v159
    %208 = vmatprep.subr.mxu0 0.0
    %209 = vmatpush1.msra.mxu0 %v158
    %210 = vmatprep.subr.mxu0 0.0
    %211 = vmatpush1.msra.mxu0 %v157
    %212 = vmatprep.subr.mxu0 0.0
    %213 = vmatpush2.msra.mxu0 0.0
    %214 = vmatprep.subr.mxu0 0.0
    %215 = vmatpush2.msra.mxu0 0.0
    %216 = vmatprep.subr.mxu0 0.0
    %217 = vmatpush2.msra.mxu0 0.0
    %218 = vmatprep.subr.mxu0 0.0
    %219 = vmatpush2.msra.mxu0 0.0
    %220 = vmatprep.subr.mxu0 0.0
    %221 = vmatpush2.msra.mxu0 0.0
    %222 = vmatprep.subr.mxu0 0.0
    %223 = vmatpush2.msra.mxu0 0.0
    %224 = vmatprep.subr.mxu0 0.0
    %225 = vmatpush2.msra.mxu0 0.0
    %226 = vmatprep.subr.mxu0 0.0
    %227 = vmatpush2.msra.mxu0 0.0
    %228 = vmatprep.subr.mxu0 0.0
    %229 = vmatpush2.msra.mxu0 0.0
    %230 = vmatprep.subr.mxu0 0.0
    %231 = vmatpush2.msra.mxu0 0.0
    %232 = vmatprep.subr.mxu0 0.0
    %233 = vmatpush2.msra.mxu0 0.0
    %234 = vmatprep.subr.mxu0 0.0
    %235 = vmatpush2.msra.mxu0 0.0
    %236 = vmatprep.subr.mxu0 0.0
    %237 = vmatpush2.msra.mxu0 0.0
    %238 = vmatprep.subr.mxu0 0.0
    %239 = vmatpush2.msra.mxu0 0.0
    %240 = vmatprep.subr.mxu0 0.0
    %241 = vmatpush2.msra.mxu0 0.0
    %242 = vmatprep.subr.mxu0 0.0
    %243 = vmatpush2.msra.mxu0 0.0
    %244 = vmatprep.mubr.f32.mxu0 0.0
    %245 = vmatmul.mubr.f32.gmra.mxu0 %v156
    %v246 = vpop.f32.mrf.mxu0
    %v247 = vadd.f32 %v178, %v246
    %v248 = vpop.f32.mrf.mxu0
    %249 = vdwg.mxu0
    %v250 = vmax.f32 %v247, 0.0
    %v251 = vld [vmem:[#allocation4] sm:$0xff]
    %v252 = vld [vmem:[#allocation4 + $0x8] sm:$0xff]
    %v253 = vld [vmem:[#allocation4 + $0x10] sm:$0xff]
    %v254 = vld [vmem:[#allocation4 + $0x18] sm:$0xff]
    %v255 = vld [vmem:[#allocation4 + $0x20] sm:$0xff]
    %v256 = vld [vmem:[#allocation4 + $0x28] sm:$0xff]
    %v257 = vld [vmem:[#allocation4 + $0x30] sm:$0xff]
    %v258 = vld [vmem:[#allocation4 + $0x38] sm:$0xff]
    %v259 = vld [vmem:[#allocation4 + $0x40] sm:$0xff]
    %v260 = vld [vmem:[#allocation4 + $0x48] sm:$0xff]
    %v261 = vld [vmem:[#allocation4 + $0x50] sm:$0xff]
    %v262 = vld [vmem:[#allocation4 + $0x58] sm:$0xff]
    %v263 = vld [vmem:[#allocation4 + $0x60] sm:$0xff]
    %v264 = vld [vmem:[#allocation4 + $0x68] sm:$0xff]
    %v265 = vld [vmem:[#allocation4 + $0x70] sm:$0xff]
    %v266 = vld [vmem:[#allocation4 + $0x78] sm:$0xff]
    %v267 = vld [vmem:[%s6] sm:$0x1]
    %v269 = vlaneseq
    %v270 = vshrl.u32 %v269, 7
    %v271 = vsub.s32 0, %v270
    %v272 = vrot.slane %v267, %v271
    %274 = vmatprep.subr.mxu0 0.0
    %275 = vmatpush1.msra.mxu0 %v266
    %276 = vmatprep.subr.mxu0 0.0
    %277 = vmatpush1.msra.mxu0 %v265
    %278 = vmatprep.subr.mxu0 0.0
    %279 = vmatpush1.msra.mxu0 %v264
    %280 = vmatprep.subr.mxu0 0.0
    %281 = vmatpush1.msra.mxu0 %v263
    %282 = vmatprep.subr.mxu0 0.0
    %283 = vmatpush1.msra.mxu0 %v262
    %284 = vmatprep.subr.mxu0 0.0
    %285 = vmatpush1.msra.mxu0 %v261
    %286 = vmatprep.subr.mxu0 0.0
    %287 = vmatpush1.msra.mxu0 %v260
    %288 = vmatprep.subr.mxu0 0.0
    %289 = vmatpush1.msra.mxu0 %v259
    %290 = vmatprep.subr.mxu0 0.0
    %291 = vmatpush1.msra.mxu0 %v258
    %292 = vmatprep.subr.mxu0 0.0
    %293 = vmatpush1.msra.mxu0 %v257
    %294 = vmatprep.subr.mxu0 0.0
    %295 = vmatpush1.msra.mxu0 %v256
    %296 = vmatprep.subr.mxu0 0.0
    %297 = vmatpush1.msra.mxu0 %v255
    %298 = vmatprep.subr.mxu0 0.0
    %299 = vmatpush1.msra.mxu0 %v254
    %300 = vmatprep.subr.mxu0 0.0
    %301 = vmatpush1.msra.mxu0 %v253
    %302 = vmatprep.subr.mxu0 0.0
    %303 = vmatpush1.msra.mxu0 %v252
    %304 = vmatprep.subr.mxu0 0.0
    %305 = vmatpush1.msra.mxu0 %v251
    %306 = vmatprep.subr.mxu0 0.0
    %307 = vmatpush2.msra.mxu0 0.0
    %308 = vmatprep.subr.mxu0 0.0
    %309 = vmatpush2.msra.mxu0 0.0
    %310 = vmatprep.subr.mxu0 0.0
    %311 = vmatpush2.msra.mxu0 0.0
    %312 = vmatprep.subr.mxu0 0.0
    %313 = vmatpush2.msra.mxu0 0.0
    %314 = vmatprep.subr.mxu0 0.0
    %315 = vmatpush2.msra.mxu0 0.0
    %316 = vmatprep.subr.mxu0 0.0
    %317 = vmatpush2.msra.mxu0 0.0
    %318 = vmatprep.subr.mxu0 0.0
    %319 = vmatpush2.msra.mxu0 0.0
    %320 = vmatprep.subr.mxu0 0.0
    %321 = vmatpush2.msra.mxu0 0.0
    %322 = vmatprep.subr.mxu0 0.0
    %323 = vmatpush2.msra.mxu0 0.0
    %324 = vmatprep.subr.mxu0 0.0
    %325 = vmatpush2.msra.mxu0 0.0
    %326 = vmatprep.subr.mxu0 0.0
    %327 = vmatpush2.msra.mxu0 0.0
    %328 = vmatprep.subr.mxu0 0.0
    %329 = vmatpush2.msra.mxu0 0.0
    %330 = vmatprep.subr.mxu0 0.0
    %331 = vmatpush2.msra.mxu0 0.0
    %332 = vmatprep.subr.mxu0 0.0
    %333 = vmatpush2.msra.mxu0 0.0
    %334 = vmatprep.subr.mxu0 0.0
    %335 = vmatpush2.msra.mxu0 0.0
    %336 = vmatprep.subr.mxu0 0.0
    %337 = vmatpush2.msra.mxu0 0.0
    %338 = vmatprep.mubr.f32.mxu0 0.0
    %339 = vmatmul.mubr.f32.gmra.mxu0 %v250
    %v340 = vpop.f32.mrf.mxu0
    %v341 = vadd.f32 %v272, %v340
    %v342 = vpop.f32.mrf.mxu0
    %343 = vdwg.mxu0
    %v344 = vmax.f32 %v341, 0.0
    %v345 = vld [vmem:[#allocation6] sm:$0xff]
    %v346 = vld [vmem:[#allocation6 + $0x8] sm:$0xff]
    %v347 = vld [vmem:[#allocation6 + $0x10] sm:$0xff]
    %v348 = vld [vmem:[#allocation6 + $0x18] sm:$0xff]
    %v349 = vld [vmem:[#allocation6 + $0x20] sm:$0xff]
    %v350 = vld [vmem:[#allocation6 + $0x28] sm:$0xff]
    %v351 = vld [vmem:[#allocation6 + $0x30] sm:$0xff]
    %v352 = vld [vmem:[#allocation6 + $0x38] sm:$0xff]
    %v353 = vld [vmem:[#allocation6 + $0x40] sm:$0xff]
    %v354 = vld [vmem:[#allocation6 + $0x48] sm:$0xff]
    %v355 = vld [vmem:[#allocation6 + $0x50] sm:$0xff]
    %v356 = vld [vmem:[#allocation6 + $0x58] sm:$0xff]
    %v357 = vld [vmem:[#allocation6 + $0x60] sm:$0xff]
    %v358 = vld [vmem:[#allocation6 + $0x68] sm:$0xff]
    %v359 = vld [vmem:[#allocation6 + $0x70] sm:$0xff]
    %v360 = vld [vmem:[#allocation6 + $0x78] sm:$0xff]
    %v361 = vld [vmem:[%s8] sm:$0x1]
    %v363 = vlaneseq
    %v364 = vshrl.u32 %v363, 7
    %v365 = vsub.s32 0, %v364
    %v366 = vrot.slane %v361, %v365
    %368 = vmatprep.subr.mxu0 0.0
    %369 = vmatpush1.msra.mxu0 %v360
    %370 = vmatprep.subr.mxu0 0.0
    %371 = vmatpush1.msra.mxu0 %v359
    %372 = vmatprep.subr.mxu0 0.0
    %373 = vmatpush1.msra.mxu0 %v358
    %374 = vmatprep.subr.mxu0 0.0
    %375 = vmatpush1.msra.mxu0 %v357
    %376 = vmatprep.subr.mxu0 0.0
    %377 = vmatpush1.msra.mxu0 %v356
    %378 = vmatprep.subr.mxu0 0.0
    %379 = vmatpush1.msra.mxu0 %v355
    %380 = vmatprep.subr.mxu0 0.0
    %381 = vmatpush1.msra.mxu0 %v354
    %382 = vmatprep.subr.mxu0 0.0
    %383 = vmatpush1.msra.mxu0 %v353
    %384 = vmatprep.subr.mxu0 0.0
    %385 = vmatpush1.msra.mxu0 %v352
    %386 = vmatprep.subr.mxu0 0.0
    %387 = vmatpush1.msra.mxu0 %v351
    %388 = vmatprep.subr.mxu0 0.0
    %389 = vmatpush1.msra.mxu0 %v350
    %390 = vmatprep.subr.mxu0 0.0
    %391 = vmatpush1.msra.mxu0 %v349
    %392 = vmatprep.subr.mxu0 0.0
    %393 = vmatpush1.msra.mxu0 %v348
    %394 = vmatprep.subr.mxu0 0.0
    %395 = vmatpush1.msra.mxu0 %v347
    %396 = vmatprep.subr.mxu0 0.0
    %397 = vmatpush1.msra.mxu0 %v346
    %398 = vmatprep.subr.mxu0 0.0
    %399 = vmatpush1.msra.mxu0 %v345
    %400 = vmatprep.subr.mxu0 0.0
    %401 = vmatpush2.msra.mxu0 0.0
    %402 = vmatprep.subr.mxu0 0.0
    %403 = vmatpush2.msra.mxu0 0.0
    %404 = vmatprep.subr.mxu0 0.0
    %405 = vmatpush2.msra.mxu0 0.0
    %406 = vmatprep.subr.mxu0 0.0
    %407 = vmatpush2.msra.mxu0 0.0
    %408 = vmatprep.subr.mxu0 0.0
    %409 = vmatpush2.msra.mxu0 0.0
    %410 = vmatprep.subr.mxu0 0.0
    %411 = vmatpush2.msra.mxu0 0.0
    %412 = vmatprep.subr.mxu0 0.0
    %413 = vmatpush2.msra.mxu0 0.0
    %414 = vmatprep.subr.mxu0 0.0
    %415 = vmatpush2.msra.mxu0 0.0
    %416 = vmatprep.subr.mxu0 0.0
    %417 = vmatpush2.msra.mxu0 0.0
    %418 = vmatprep.subr.mxu0 0.0
    %419 = vmatpush2.msra.mxu0 0.0
    %420 = vmatprep.subr.mxu0 0.0
    %421 = vmatpush2.msra.mxu0 0.0
    %422 = vmatprep.subr.mxu0 0.0
    %423 = vmatpush2.msra.mxu0 0.0
    %424 = vmatprep.subr.mxu0 0.0
    %425 = vmatpush2.msra.mxu0 0.0
    %426 = vmatprep.subr.mxu0 0.0
    %427 = vmatpush2.msra.mxu0 0.0
    %428 = vmatprep.subr.mxu0 0.0
    %429 = vmatpush2.msra.mxu0 0.0
    %430 = vmatprep.subr.mxu0 0.0
    %431 = vmatpush2.msra.mxu0 0.0
    %432 = vmatprep.mubr.f32.mxu0 0.0
    %433 = vmatmul.mubr.f32.gmra.mxu0 %v344
    %v434 = vpop.f32.mrf.mxu0
    %v435 = vadd.f32 %v366, %v434
    %v436 = vpop.f32.mrf.mxu0
    %437 = vdwg.mxu0
    %438 = vmax.xlane.f32.xlu0 %v435
    %v439 = vpop.xlane.xlu0 %438
    %v440 = vsub.f32 %v435, %v439
    %v441 = vmul.f32 %v440, 1.442695
    %v442 = vpow.pop %v441
    %443 = vadd.xlane.f32.xlu0 %v442
    %v444 = vpop.xlane.xlu0 %443
    %v445 = vrcp.pop %v444
    %v446 = vmul.f32 %v442, %v445
    %447 = vst [vmem:[%s9] sm:$0xff] %v446
    // Predicated region
    $region50: #{actor_forward.1} parent=1 // pred_check
      _
    $region51: #{actor_forward.1} parent=1 // pred_check_branch
      %449 = sbr.rel (0) target = $region53
    $region52: #{actor_forward.1} parent=1 // pred_region
      _
    $region53: #{actor_forward.1} parent=1 // pred_fallthru
      _
    // Predicated region
    $region54: #{actor_forward.1} parent=1 // pred_check
      _
    $region55: #{actor_forward.1} parent=1 // pred_check_branch
      %451 = sbr.rel (0) target = $region57
    $region56: #{actor_forward.1} parent=1 // pred_region
      _
    $region57: #{actor_forward.1} parent=1 // pred_fallthru
      _
    %452 = vsyncpa [#allocation3], 1
    %453 = vsyncpa [#allocation5], 1

</llo_original>
